<compile_context>
chip_gen: v7x
topology: tpu7x:2x2x1
jax: 0.10.0
libtpu: 0.0.40
codegen_flags: <defaults>
</compile_context>

<pallas_src>
import jax
import jax.numpy as jnp
from jax.experimental import pallas as pl
from jax.experimental.pallas import tpu as pltpu


def _scale_kernel(scale_ref, x_ref, o_ref):
    # scale_ref: (1,) f32 in SMEM; x_ref/o_ref: lane-dense VMEM tiles.
    # Multiply in the tensor dtype (matches PyTorch scalar*tensor promotion).
    s = scale_ref[0].astype(o_ref.dtype)
    o_ref[...] = x_ref[...] * s


def _block_config():
    """Generation-aware (target_block_bytes, vmem_limit_bytes)."""
    vmem_phys = 64 << 20  # conservative default (v7x per-TC VMEM)
    try:
        info = pltpu.get_tpu_info()
        vmem_phys = int(getattr(info, "vmem_capacity_bytes", vmem_phys))
    except Exception:
        pass
    if vmem_phys <= (64 << 20):
        # v7x-class: 64 MiB VMEM, fastest HBM. 8 MiB blocks keep the
        # ~0.35 us/step overhead < ~10%; 2-in + 2-out double buffers = 32 MiB,
        # limit kept well under physical VMEM.
        return 8 << 20, 48 << 20
    # v5e / v6e-class (128 MiB VMEM): 4 MiB blocks sit on the measured
    # roofline plateau; 16 MiB double-buffered, explicit 32 MiB scoped limit.
    return 4 << 20, 32 << 20


def scale_pallas(x, scale, *, target_block_bytes=None, min_pallas_bytes=256 * 1024):
    """y = x * scale.  Lane-dense tiled Pallas TPU kernel with XLA fast paths."""
    orig_shape = x.shape
    dtype = x.dtype
    total = int(x.size)
    itemsize = jnp.dtype(dtype).itemsize
    total_bytes = total * itemsize

    # Plain-XLA fast paths (roofline-optimal, fusable, no relayout passes):
    #   * tiny tensors: pallas_call launch/DMA setup dwarfs a few-KiB stream.
    #   * flat length not a multiple of 128: pad/slice or bulk+tail+concat
    #     would each add >= 1 extra full HBM pass on top of the 2N-byte floor.
    if total == 0 or total_bytes < min_pallas_bytes or total % 128 != 0:
        return x * jnp.asarray(scale, dtype=dtype)

    # Lane-dense 2D view. For a contiguous row-major array this reshape is a
    # layout-preserving bitcast (no HBM copy), unlike tiling the raw W=16
    # last dim which would emit masked partial stores.
    lanes = next(c for c in (1024, 512, 256, 128) if total % c == 0)
    rows = total // lanes
    x2d = x.reshape(rows, lanes)

    default_block_bytes, vmem_limit = _block_config()
    block_bytes = default_block_bytes if target_block_bytes is None else target_block_bytes

    # Sublane floor per dtype: sub-32-bit dtypes pack 2/4 rows per sublane.
    min_rows = max(8, 32 // itemsize)          # 8 f32 / 16 bf16 / 32 int8
    bytes_per_row = lanes * itemsize
    row_tile = max(min_rows, (block_bytes // bytes_per_row) // min_rows * min_rows)

    # Ensure >= 2 grid steps on anything bigger than ~1 MiB so the "parallel"
    # axis can shard across v7x's two TensorCores and I/O DMAs overlap.
    if rows > min_rows and total_bytes > (1 << 20):
        half = ((rows + 1) // 2 + min_rows - 1) // min_rows * min_rows
        row_tile = min(row_tile, max(min_rows, half))

    if rows <= row_tile:
        grid = (1,)
        blk = (rows, lanes)        # full second-to-last dim -> (8,128) rule ok
    else:
        grid = (pl.cdiv(rows, row_tile),)
        blk = (row_tile, lanes)    # boundary block masked by Pallas

    index_map = lambda i: (i, 0)
    scale_arr = jnp.asarray([scale], dtype=jnp.float32)   # SMEM scalar operand

    y2d = pl.pallas_call(
        _scale_kernel,
        out_shape=jax.ShapeDtypeStruct((rows, lanes), dtype),
        grid=grid,
        in_specs=[
            pl.BlockSpec(memory_space=pltpu.MemorySpace.SMEM),  # scale scalar
            pl.BlockSpec(blk, index_map),
        ],
        out_specs=pl.BlockSpec(blk, index_map),
        compiler_params=pltpu.CompilerParams(
            dimension_semantics=("parallel",),
            vmem_limit_bytes=vmem_limit,
        ),
        cost_estimate=pl.CostEstimate(
            flops=total, transcendentals=0, bytes_accessed=2 * total_bytes
        ),
    )(scale_arr, x2d)

    return y2d.reshape(orig_shape)   # bitcast back to the original NCHW shape


if __name__ == "__main__":
    key = jax.random.PRNGKey(0)
    scale = 0.5  # deterministic "parameter" from the module's __init__

    # Primary small NCHW input consistent with Scale's use on conv feature maps.
    x = jax.random.normal(key, (2, 4, 16, 16), dtype=jnp.float32)

    # 1) Force the Pallas kernel on the primary shape (the tiny-input fast
    #    path would otherwise handle it with a plain fused multiply).
    y = scale_pallas(x, scale, min_pallas_bytes=0)
    jax.block_until_ready(y)
    assert y.shape == x.shape and y.dtype == x.dtype
    assert jnp.allclose(y, x * scale, atol=1e-6, rtol=1e-6)

    # 2) Default call on the same shape (tiny-input fast path).
    y_fast = scale_pallas(x, scale)
    jax.block_until_ready(y_fast)
    assert jnp.allclose(y_fast, x * scale, atol=1e-6, rtol=1e-6)

    k1, k2, k3 = jax.random.split(key, 3)

    # 3) Multi-block tiled path (>= 2 grid steps; small block override).
    x_big = jax.random.normal(k1, (8, 32, 64, 64), dtype=jnp.float32)  # 4 MiB
    y_big = scale_pallas(x_big, scale, target_block_bytes=1 << 20)
    jax.block_until_ready(y_big)
    assert jnp.allclose(y_big, x_big * scale, atol=1e-6, rtol=1e-6)

    # 4) Flat length not a multiple of 128 -> roofline-optimal XLA fallback.
    x_odd = jax.random.normal(k2, (2, 3, 15, 15), dtype=jnp.float32)
    y_odd = scale_pallas(x_odd, scale)
    jax.block_until_ready(y_odd)
    assert jnp.allclose(y_odd, x_odd * scale, atol=1e-6, rtol=1e-6)

    # 5) bf16 path (exercises the dtype-aware sublane floor).
    x_bf16 = jax.random.normal(k3, (4, 8, 64, 64), dtype=jnp.bfloat16)
    y_bf16 = scale_pallas(x_bf16, scale, min_pallas_bytes=0)
    jax.block_until_ready(y_bf16)
    ref_bf16 = x_bf16 * jnp.asarray(scale, dtype=jnp.bfloat16)
    assert jnp.allclose(y_bf16.astype(jnp.float32), ref_bf16.astype(jnp.float32))

    print("KERNEL_OK")
</pallas_src>

<mosaic_0001>
module attributes {stable_mosaic.version = 11 : i64} {
  func.func @_scale_kernel(%arg0: i32, %arg1: memref<1xf32, #tpu.memory_space<smem>>, %arg2: memref<2x1024xf32, #tpu.memory_space<vmem>>, %arg3: memref<2x1024xf32, #tpu.memory_space<vmem>>) attributes {dimension_semantics = [#tpu.dimension_semantics<parallel>], iteration_bounds = array<i64: 1>, scalar_prefetch = 0 : i64, scratch_operands = 0 : i64, tpu.core_type = #tpu.core_type<tc>, window_params = [{transform_indices = @transform_0, window_bounds = array<i64: 1>}, {transform_indices = @transform_1, window_bounds = array<i64: 2, 1024>}, {transform_indices = @transform_2, window_bounds = array<i64: 2, 1024>}]} {
    %c0 = arith.constant 0 : index
    %0 = memref.load %arg1[%c0] : memref<1xf32, #tpu.memory_space<smem>>
    %c0_0 = arith.constant 0 : index
    %c0_1 = arith.constant 0 : index
    %1 = vector.load %arg2[%c0_0, %c0_1] : memref<2x1024xf32, #tpu.memory_space<vmem>>, vector<2x1024xf32>
    %2 = vector.broadcast %0 : f32 to vector<2x1024xf32>
    %3 = arith.mulf %1, %2 : vector<2x1024xf32>
    %c0_2 = arith.constant 0 : index
    %c0_3 = arith.constant 0 : index
    %4 = vector.load %arg3[%c0_2, %c0_3] : memref<2x1024xf32, #tpu.memory_space<vmem>>, vector<2x1024xf32>
    tpu.vector_store %arg3[%c0_2, %c0_3], %3 {strides = array<i32>} : memref<2x1024xf32, #tpu.memory_space<vmem>>, vector<2x1024xf32>,
    return
  }
  func.func @transform_0(%arg0: i32) -> i32 {
    %c0_i32 = arith.constant 0 : i32
    %c0_i32_0 = arith.constant 0 : i32
    return %c0_i32 : i32
  }
  func.func @transform_1(%arg0: i32) -> (i32, i32) {
    %c0_i32 = arith.constant 0 : i32
    %c0_i32_0 = arith.constant 0 : i32
    return %arg0, %c0_i32 : i32, i32
  }
  func.func @transform_2(%arg0: i32) -> (i32, i32) {
    %c0_i32 = arith.constant 0 : i32
    %c0_i32_0 = arith.constant 0 : i32
    return %arg0, %c0_i32 : i32, i32
  }
}

</mosaic_0001>

<llo_original>
// kernel: tpu_custom_call.1
$region0: #{tpu_custom_call.1}
  #allocation0 [shape = 'u32[]', space=smem, size = 0x4, offset = 0x4, fixed_abs, tag = 'smem constant byte address 0x4 - core index']
  #allocation1 [shape = 'u32[144,128]{1,0:T(1,128)}', space=vmem, size = 0x12000, scoped, tag = 'internal scratch']
  #allocation2 [shape = 'f32[1]{0:T(128)S(6)}', space=smem, size = 0x200, scoped, tag = 'scoped memory for tpu_custom_call.1']
  %s0 = inlined_call_operand.<no memory space> [shape: f32[1], index: 0, kind: input, shape index: {}]
  %s1 = inlined_call_operand.hbm [shape: f32[2,1024], index: 1, kind: input, shape index: {}]
  %s2 = inlined_call_operand.hbm [shape: f32[2,1024], index: 2, kind: output, shape index: {}]
  %s3 = sld [smem:[#allocation0]]
  $region22: #{tpu_custom_call.1} parent=0
    _
  %s5 = ssub.s32 1, %s3
  %s6 = scalar_select 0, %s5, %s3
  %7 = sst [smem:[#allocation2]] %s0
  $region1: #{tpu_custom_call.1} parent=0
    #allocation3 [shape = 'u8[8192]{0}', space=vmem, size = 0x2000, scoped, tag = 'input window, operand 1, single buffered']
    #allocation4 [shape = 's32[1]{0}', space=sflag, size = 0x4, scoped, tag = 'scoped memory for tpu_custom_call.1']
    #allocation5 [shape = 's32[1]{0}', space=sflag, size = 0x4, scoped, tag = 'scoped memory for tpu_custom_call.1']
    #allocation6 [shape = 'u8[8192]{0}', space=vmem, size = 0x2000, scoped, tag = 'output window, operand 0, single buffered']
    %8 = vsyncpa [#allocation4], 0
    %9 = vsyncpa [#allocation5], 0
    // Predicated region
    $region2: #{tpu_custom_call.1} parent=1 // pred_check
      _
    $region3: #{tpu_custom_call.1} parent=1 // pred_check_branch
      %11 = sbr.rel (0) target = $region5
    $region4: #{tpu_custom_call.1} parent=1 // pred_region
      _
    $region5: #{tpu_custom_call.1} parent=1 // pred_fallthru
      _
    // Predicated region
    $region6: #{tpu_custom_call.1} parent=1 // pred_check
      _
    $region7: #{tpu_custom_call.1} parent=1 // pred_check_branch
      %13 = sbr.rel (0) target = $region9
    $region8: #{tpu_custom_call.1} parent=1 // pred_region
      %s15 = ssub.s32 256, 256
      %16 = vsyncadd [#allocation4], %s15
      %s18 = sshll.u32 [#allocation3], 4
      %s19 = int_to_ptr.vmem [resolvable:$true] %s18
      %21 = dma.hbm_to_vmem [thread:$0]  %s1, 256, %s19, [#allocation4]
    $region9: #{tpu_custom_call.1} parent=1 // pred_fallthru
      _
    // Predicated region
    $region10: #{tpu_custom_call.1} parent=1 // pred_check
      _
    $region11: #{tpu_custom_call.1} parent=1 // pred_check_branch
      %23 = sbr.rel (0) target = $region13
    $region12: #{tpu_custom_call.1} parent=1 // pred_region
      %24 = dma.done [#allocation4], 256
    $region13: #{tpu_custom_call.1} parent=1 // pred_fallthru
      _
    %s25 = sld [smem:[#allocation2]]
    %v26 = vld [vmem:[#allocation3] sm:$0xff]
    %v27 = vld [vmem:[#allocation3 + $0x8] sm:$0xff]
    %v28 = vstv %s25
    %v29 = vmul.f32 %v26, %v28
    %v30 = vmul.f32 %v27, %v28
    %31 = vst [vmem:[#allocation6] sm:$0xff] %v29
    %32 = vst [vmem:[#allocation6 + $0x8] sm:$0xff] %v30
    // Predicated region
    $region14: #{tpu_custom_call.1} parent=1 // pred_check
      _
    $region15: #{tpu_custom_call.1} parent=1 // pred_check_branch
      %34 = sbr.rel (0) target = $region17
    $region16: #{tpu_custom_call.1} parent=1 // pred_region
      %s36 = ssub.s32 256, 256
      %37 = vsyncadd [#allocation5], %s36
      %s39 = sshll.u32 [#allocation6], 4
      %s40 = int_to_ptr.vmem [resolvable:$true] %s39
      %42 = dma.vmem_to_hbm [thread:$0]  %s40, 256, %s2, [#allocation5]
    $region17: #{tpu_custom_call.1} parent=1 // pred_fallthru
      _
    // Predicated region
    $region18: #{tpu_custom_call.1} parent=1 // pred_check
      _
    $region19: #{tpu_custom_call.1} parent=1 // pred_check_branch
      %44 = sbr.rel (0) target = $region21
    $region20: #{tpu_custom_call.1} parent=1 // pred_region
      %45 = dma.done [#allocation5], 256
    $region21: #{tpu_custom_call.1} parent=1 // pred_fallthru
      _
    %46 = vsyncpa [#allocation4], 1
    %47 = vsyncpa [#allocation5], 1

</llo_original>
